<compile_context>
chip_gen: v6e
topology: v6e:2x2x1
jax: 0.10.0
libtpu: 0.0.40
codegen_flags: <defaults>
</compile_context>

<pallas_src>
import math
import numpy as np
import jax
import jax.numpy as jnp
from jax import lax
from jax.experimental import pallas as pl
from jax.experimental.pallas import tpu as pltpu

LN_EPS = 1e-12


def _align8(n):
    return (n + 7) // 8 * 8


def _gelu_exact(x):
    # recbole 'gelu': x * 0.5 * (1 + erf(x / sqrt(2)))  (exact erf, not tanh approx)
    return x * 0.5 * (1.0 + lax.erf(x * (1.0 / math.sqrt(2.0))))


def _layernorm(v, g, b, eps):
    # center once, reuse the centered tensor for the variance
    mean = jnp.mean(v, axis=-1, keepdims=True)
    c = v - mean
    var = jnp.mean(c * c, axis=-1, keepdims=True)
    return c * lax.rsqrt(var + eps) * g + b


def make_layout(S, H, I):
    """Constant-pack layout.  B-independent (no batch block-diagonalization)."""
    F = S // 2 + 1
    F4 = 4 * F
    # pack A: everything whose lane width fits in max(H, S, 4F)
    WA = max(H, S, F4)
    off = 0
    W4_OFF = off; off += _align8(F4)    # forward rfft matrix, 4-way stacked   (4F, S)
    M4_OFF = off; off += _align8(S)     # inverse irfft matrix, 4-way stacked  (S, 4F)
    CW_OFF = off; off += _align8(F4)    # masked complex filter weight         (4F, H)
    V_OFF = off;  off += _align8(5)     # ln1_g, ln1_b, ln2_g, ln2_b, b2       (1, H) each
    W2_OFF = off; off += _align8(I)     # w2                                   (I, H)
    ROWS_A = off
    # pack B: the I-wide operands
    WB = I
    W1_OFF = 0                          # w1                                   (H, I)
    B1_OFF = _align8(H)                 # b1                                   (1, I)
    ROWS_B = B1_OFF + _align8(1)
    return dict(F=F, F4=F4, WA=WA, ROWS_A=ROWS_A, WB=WB, ROWS_B=ROWS_B,
                W4_OFF=W4_OFF, M4_OFF=M4_OFF, CW_OFF=CW_OFF, V_OFF=V_OFF,
                W2_OFF=W2_OFF, W1_OFF=W1_OFF, B1_OFF=B1_OFF)


def pack_constants(layout, S, H, I, params, left, right):
    """Exact DFT matrices, mask folding, 4-way stacking, lane-width-grouped packing.
    Everything here is B-independent wrapper plumbing."""
    F = layout['F']

    # exact rfft / irfft (norm='ortho') as real linear maps, built from identity bases
    eye_s = jnp.eye(S, dtype=jnp.float32)
    rf = jnp.fft.rfft(eye_s, axis=0, norm='ortho')                                  # (F, S) complex
    wre = jnp.real(rf).astype(jnp.float32)
    wim = jnp.imag(rf).astype(jnp.float32)
    eye_f = jnp.eye(F, dtype=jnp.complex64)
    mre = jnp.fft.irfft(eye_f, n=S, axis=0, norm='ortho').astype(jnp.float32)       # (S, F)
    mim = jnp.fft.irfft(1j * eye_f, n=S, axis=0, norm='ortho').astype(jnp.float32)  # (S, F)

    # fold the frequency zero-mask (x[:, :left]=0, x[:, right:]=0) into the weight (exact)
    mask = ((jnp.arange(F) >= left) & (jnp.arange(F) < right)).astype(jnp.float32)[:, None]
    cwre = params['cw_re'] * mask
    cwim = params['cw_im'] * mask

    # 4-way stacking: one matmul per FFT direction, complex multiply -> one elementwise op
    #   [Re;Im;Re;Im] @ x = [Xre;Xim;Xre;Xim]
    #   * [cwre;-cwim;cwim;cwre]            (elementwise)
    #   [mre|mre|mim|mim] @ (...) = mre@(Xre*cwre - Xim*cwim) + mim@(Xre*cwim + Xim*cwre)
    w4 = jnp.concatenate([wre, wim, wre, wim], axis=0)        # (4F, S)
    m4 = jnp.concatenate([mre, mre, mim, mim], axis=1)        # (S, 4F)
    cw4 = jnp.concatenate([cwre, -cwim, cwim, cwre], axis=0)  # (4F, H)

    def place(buf, row, arr):
        r, c = arr.shape
        return buf.at[row:row + r, :c].set(arr)

    pa = jnp.zeros((layout['ROWS_A'], layout['WA']), jnp.float32)
    pa = place(pa, layout['W4_OFF'], w4)
    pa = place(pa, layout['M4_OFF'], m4)
    pa = place(pa, layout['CW_OFF'], cw4)
    pa = place(pa, layout['V_OFF'] + 0, params['ln1_g'])
    pa = place(pa, layout['V_OFF'] + 1, params['ln1_b'])
    pa = place(pa, layout['V_OFF'] + 2, params['ln2_g'])
    pa = place(pa, layout['V_OFF'] + 3, params['ln2_b'])
    pa = place(pa, layout['V_OFF'] + 4, params['b2'])
    pa = place(pa, layout['W2_OFF'], params['w2'])

    pb = jnp.zeros((layout['ROWS_B'], layout['WB']), jnp.float32)
    pb = place(pb, layout['W1_OFF'], params['w1'])
    pb = place(pb, layout['B1_OFF'], params['b1'])
    return pa, pb


def make_fmblock(B, S, H, I, layout, block_b=None):
    """Pallas wrapper: grid over batch tiles; constants resident; O(B) compute."""
    F4 = layout['F4']
    if block_b is None:
        block_b = min(B, 64)     # >= 512 token rows per grid step once B is large
    assert B % block_b == 0, "batch must divide evenly into batch tiles"
    nb = B // block_b
    TB = block_b
    TBS = TB * S

    W4_OFF, M4_OFF, CW_OFF = layout['W4_OFF'], layout['M4_OFF'], layout['CW_OFF']
    V_OFF, W2_OFF = layout['V_OFF'], layout['W2_OFF']
    W1_OFF, B1_OFF = layout['W1_OFF'], layout['B1_OFF']
    ROWS_A, WA = layout['ROWS_A'], layout['WA']
    ROWS_B, WB = layout['ROWS_B'], layout['WB']

    def kernel(x_ref, pa_ref, pb_ref, o_ref):
        x2 = x_ref[...]                                            # (TB*S, H) f32

        # static slices of the two packed constant operands (resident across the grid)
        w4 = pa_ref[W4_OFF:W4_OFF + F4, :S]                        # (4F, S)
        m4 = pa_ref[M4_OFF:M4_OFF + S, :F4]                        # (S, 4F)
        cw4 = pa_ref[CW_OFF:CW_OFF + F4, :H]                       # (4F, H)
        ln1_g = pa_ref[V_OFF + 0:V_OFF + 1, :H]
        ln1_b = pa_ref[V_OFF + 1:V_OFF + 2, :H]
        ln2_g = pa_ref[V_OFF + 2:V_OFF + 3, :H]
        ln2_b = pa_ref[V_OFF + 3:V_OFF + 4, :H]
        b2 = pa_ref[V_OFF + 4:V_OFF + 5, :H]
        w2 = pa_ref[W2_OFF:W2_OFF + I, :H]                         # (I, H)
        w1 = pb_ref[W1_OFF:W1_OFF + H, :I]                         # (H, I)
        b1 = pb_ref[B1_OFF:B1_OFF + 1, :I]                         # (1, I)

        # ---- FilterMixer: rfft -> masked complex weight -> irfft ------------------
        # Batched over the TB batch elements of this grid step with SHARED DFT
        # matrices (O(B) FLOPs / O(1) constants; the kron block-diag is gone).
        # S is a multiple of the sublane tile (8), so the (TB*S,H) <-> (TB,S,H)
        # reshapes are layout-free.
        x3 = x2.reshape(TB, S, H)
        w4b = jnp.broadcast_to(w4[None], (TB, F4, S))
        m4b = jnp.broadcast_to(m4[None], (TB, S, F4))
        cw4b = jnp.broadcast_to(cw4[None], (TB, F4, H))
        xq = jnp.einsum('bfs,bsh->bfh', w4b, x3,
                        preferred_element_type=jnp.float32)        # (TB, 4F, H)
        sq = jnp.einsum('bsf,bfh->bsh', m4b, xq * cw4b,
                        preferred_element_type=jnp.float32)        # (TB, S, H)
        seq_fft = sq.reshape(TBS, H)

        # dropout = identity (eval); residual + LayerNorm
        h = _layernorm(seq_fft + x2, ln1_g, ln1_b, LN_EPS)

        # ---- FeedForward: dense1 -> gelu -> dense2 -> residual LayerNorm ----------
        # (f32 MXU inputs kept on purpose: bf16 would break the strict f32 check)
        h1 = _gelu_exact(jnp.dot(h, w1, preferred_element_type=jnp.float32) + b1)   # (TBS, I)
        h2 = jnp.dot(h1, w2, preferred_element_type=jnp.float32) + b2               # (TBS, H)
        o_ref[...] = _layernorm(h2 + h, ln2_g, ln2_b, LN_EPS).astype(o_ref.dtype)

    def pallas_fn(x, pa, pb):
        x2 = x.reshape(B * S, H).astype(jnp.float32)   # token-major 2-D view (wrapper plumbing)
        out2 = pl.pallas_call(
            kernel,
            out_shape=jax.ShapeDtypeStruct((B * S, H), jnp.float32),
            grid=(nb,),
            in_specs=[
                pl.BlockSpec((TBS, H), lambda i: (i, 0)),          # batch tile of tokens
                pl.BlockSpec((ROWS_A, WA), lambda i: (0, 0)),      # resident constant pack A
                pl.BlockSpec((ROWS_B, WB), lambda i: (0, 0)),      # resident constant pack B
            ],
            out_specs=pl.BlockSpec((TBS, H), lambda i: (i, 0)),
            compiler_params=pltpu.CompilerParams(
                dimension_semantics=("parallel",)),                # megacore split on v7x
        )(x2, pa, pb)
        return out2.reshape(B, S, H)

    return pallas_fn


# ------------------------- pure-JAX reference (for the check) ---------------------------

def fmblock_ref(x, params, left, right):
    B, S, H = x.shape
    xf = jnp.fft.rfft(x.astype(jnp.float32), axis=1, norm='ortho')
    F = S // 2 + 1
    mask = ((jnp.arange(F) >= left) & (jnp.arange(F) < right)).astype(jnp.float32)
    xf = xf * mask[None, :, None]
    weight = params['cw_re'] + 1j * params['cw_im']
    seq_fft = jnp.fft.irfft(xf * weight[None], n=S, axis=1, norm='ortho')

    def ln(v, g, b, eps):
        m = jnp.mean(v, axis=-1, keepdims=True)
        var = jnp.mean((v - m) ** 2, axis=-1, keepdims=True)
        return (v - m) / jnp.sqrt(var + eps) * g + b

    h = ln(seq_fft + x, params['ln1_g'], params['ln1_b'], LN_EPS)
    h1 = h @ params['w1'] + params['b1']
    h1 = h1 * 0.5 * (1.0 + lax.erf(h1 / math.sqrt(2.0)))
    h2 = h1 @ params['w2'] + params['b2']
    return ln(h2 + h, params['ln2_g'], params['ln2_b'], LN_EPS)


# ---------------------------------------- main -------------------------------------------

if __name__ == "__main__":
    B, S, H, I = 2, 8, 32, 64
    n_layers = 2
    dynamic_ratio = 0.5
    i_layer = 0                                   # filter_mixer='G', slide_mode='one'
    F = S // 2 + 1
    slide_step = F * (1 - dynamic_ratio) // (n_layers - 1)
    left = int(F * (1 - dynamic_ratio) - i_layer * slide_step)
    right = int(F - i_layer * slide_step)

    key = jax.random.PRNGKey(0)
    ks = jax.random.split(key, 8)

    cw = jax.random.normal(ks[0], (1, F, H, 2), dtype=jnp.float32) * 0.02
    params = {
        'cw_re': cw[0, :, :, 0],
        'cw_im': cw[0, :, :, 1],
        'ln1_g': jnp.ones((1, H), jnp.float32),
        'ln1_b': jnp.zeros((1, H), jnp.float32),
        'w1': jax.random.normal(ks[1], (H, I), jnp.float32) * 0.02,
        'b1': jax.random.normal(ks[2], (1, I), jnp.float32) * 0.02,
        'w2': jax.random.normal(ks[3], (I, H), jnp.float32) * 0.02,
        'b2': jax.random.normal(ks[4], (1, H), jnp.float32) * 0.02,
        'ln2_g': jnp.ones((1, H), jnp.float32),
        'ln2_b': jnp.zeros((1, H), jnp.float32),
    }
    x = jax.random.normal(ks[5], (B, S, H), dtype=jnp.float32)

    layout = make_layout(S, H, I)                              # B-independent
    pa, pb = pack_constants(layout, S, H, I, params, left, right)

    # primary check at the module's small shapes (B=2 -> single grid step)
    fmblock = make_fmblock(B, S, H, I, layout)
    out = jax.block_until_ready(fmblock(x, pa, pb))
    ref = jax.block_until_ready(fmblock_ref(x, params, left, right))
    np.testing.assert_allclose(np.asarray(out), np.asarray(ref), rtol=1e-3, atol=1e-4)

    # secondary check: multi-step batched grid (parallel axis, resident constants reused)
    B_big = 16
    x_big = jax.random.normal(ks[6], (B_big, S, H), dtype=jnp.float32)
    fmblock_big = make_fmblock(B_big, S, H, I, layout, block_b=8)   # grid=(2,)
    out_big = jax.block_until_ready(fmblock_big(x_big, pa, pb))
    ref_big = jax.block_until_ready(fmblock_ref(x_big, params, left, right))
    np.testing.assert_allclose(np.asarray(out_big), np.asarray(ref_big), rtol=1e-3, atol=1e-4)

    print("KERNEL_OK")
</pallas_src>

<mosaic_0001>
module attributes {stable_mosaic.version = 11 : i64} {
  func.func @kernel(%arg0: i32, %arg1: memref<16x32xf32, #tpu.memory_space<vmem>>, %arg2: memref<128x32xf32, #tpu.memory_space<vmem>>, %arg3: memref<40x64xf32, #tpu.memory_space<vmem>>, %arg4: memref<16x32xf32, #tpu.memory_space<vmem>>) attributes {dimension_semantics = [#tpu.dimension_semantics<parallel>], iteration_bounds = array<i64: 1>, scalar_prefetch = 0 : i64, scratch_operands = 0 : i64, tpu.core_type = #tpu.core_type<tc>, window_params = [{transform_indices = @transform_0, window_bounds = array<i64: 16, 32>}, {pipeline_mode = #tpu.pipeline_mode<synchronous>, transform_indices = @transform_1, window_bounds = array<i64: 128, 32>}, {pipeline_mode = #tpu.pipeline_mode<synchronous>, transform_indices = @transform_2, window_bounds = array<i64: 40, 64>}, {transform_indices = @transform_3, window_bounds = array<i64: 16, 32>}]} {
    %c0 = arith.constant 0 : index
    %c0_0 = arith.constant 0 : index
    %0 = vector.load %arg1[%c0, %c0_0] : memref<16x32xf32, #tpu.memory_space<vmem>>, vector<16x32xf32>
    %c0_1 = arith.constant 0 : index
    %c0_2 = arith.constant 0 : index
    %1 = vector.load %arg2[%c0_1, %c0_2] : memref<128x32xf32, #tpu.memory_space<vmem>>, vector<20x8xf32>
    %c24 = arith.constant 24 : index
    %c0_3 = arith.constant 0 : index
    %2 = vector.load %arg2[%c24, %c0_3] : memref<128x32xf32, #tpu.memory_space<vmem>>, vector<8x20xf32>
    %c32 = arith.constant 32 : index
    %c0_4 = arith.constant 0 : index
    %3 = vector.load %arg2[%c32, %c0_4] : memref<128x32xf32, #tpu.memory_space<vmem>>, vector<20x32xf32>
    %c56 = arith.constant 56 : index
    %c0_5 = arith.constant 0 : index
    %4 = vector.load %arg2[%c56, %c0_5] : memref<128x32xf32, #tpu.memory_space<vmem>>, vector<1x32xf32>
    %c57 = arith.constant 57 : index
    %c0_6 = arith.constant 0 : index
    %5 = vector.load %arg2[%c57, %c0_6] : memref<128x32xf32, #tpu.memory_space<vmem>>, vector<1x32xf32>
    %c58 = arith.constant 58 : index
    %c0_7 = arith.constant 0 : index
    %6 = vector.load %arg2[%c58, %c0_7] : memref<128x32xf32, #tpu.memory_space<vmem>>, vector<1x32xf32>
    %c59 = arith.constant 59 : index
    %c0_8 = arith.constant 0 : index
    %7 = vector.load %arg2[%c59, %c0_8] : memref<128x32xf32, #tpu.memory_space<vmem>>, vector<1x32xf32>
    %c60 = arith.constant 60 : index
    %c0_9 = arith.constant 0 : index
    %8 = vector.load %arg2[%c60, %c0_9] : memref<128x32xf32, #tpu.memory_space<vmem>>, vector<1x32xf32>
    %c64 = arith.constant 64 : index
    %c0_10 = arith.constant 0 : index
    %9 = vector.load %arg2[%c64, %c0_10] : memref<128x32xf32, #tpu.memory_space<vmem>>, vector<64x32xf32>
    %c0_11 = arith.constant 0 : index
    %c0_12 = arith.constant 0 : index
    %10 = vector.load %arg3[%c0_11, %c0_12] : memref<40x64xf32, #tpu.memory_space<vmem>>, vector<32x64xf32>
    %c32_13 = arith.constant 32 : index
    %c0_14 = arith.constant 0 : index
    %11 = vector.load %arg3[%c32_13, %c0_14] : memref<40x64xf32, #tpu.memory_space<vmem>>, vector<1x64xf32>
    %12 = vector.shape_cast %0 : vector<16x32xf32> to vector<2x8x32xf32>
    %13 = vector.shape_cast %1 : vector<20x8xf32> to vector<1x20x8xf32>
    %14 = vector.shape_cast %13 : vector<1x20x8xf32> to vector<1x20x8xf32>
    %15 = vector.broadcast %14 : vector<1x20x8xf32> to vector<2x20x8xf32>
    %16 = vector.shape_cast %2 : vector<8x20xf32> to vector<1x8x20xf32>
    %17 = vector.shape_cast %16 : vector<1x8x20xf32> to vector<1x8x20xf32>
    %18 = vector.broadcast %17 : vector<1x8x20xf32> to vector<2x8x20xf32>
    %19 = vector.shape_cast %3 : vector<20x32xf32> to vector<1x20x32xf32>
    %20 = vector.shape_cast %19 : vector<1x20x32xf32> to vector<1x20x32xf32>
    %21 = vector.broadcast %20 : vector<1x20x32xf32> to vector<2x20x32xf32>
    "tpu.trace_start"() <{level = 10 : i32, message = "bfs,bsh->bfh"}> : () -> ()
    %cst = arith.constant dense<0.000000e+00> : vector<2x20x32xf32>
    %22 = tpu.matmul %15, %12, %cst {dimension_numbers = #tpu.dot_dimension_numbers<[2], [1], [1], [2], [0, 0, 0, 1, 1, 2], [0], [0]>} : vector<2x20x8xf32>, vector<2x8x32xf32>, vector<2x20x32xf32> -> vector<2x20x32xf32>
    "tpu.trace_stop"() : () -> ()
    %23 = arith.mulf %22, %21 : vector<2x20x32xf32>
    "tpu.trace_start"() <{level = 10 : i32, message = "bsf,bfh->bsh"}> : () -> ()
    %cst_15 = arith.constant dense<0.000000e+00> : vector<2x8x32xf32>
    %24 = tpu.matmul %18, %23, %cst_15 {dimension_numbers = #tpu.dot_dimension_numbers<[2], [1], [1], [2], [0, 0, 0, 1, 1, 2], [0], [0]>} : vector<2x8x20xf32>, vector<2x20x32xf32>, vector<2x8x32xf32> -> vector<2x8x32xf32>
    "tpu.trace_stop"() : () -> ()
    %25 = vector.shape_cast %24 : vector<2x8x32xf32> to vector<16x32xf32>
    %26 = arith.addf %25, %0 : vector<16x32xf32>
    %cst_16 = arith.constant dense<0.000000e+00> : vector<16xf32>
    %27 = vector.multi_reduction <add>, %26, %cst_16 [1] : vector<16x32xf32> to vector<16xf32>
    %28 = vector.shape_cast %27 : vector<16xf32> to vector<16x1xf32>
    %cst_17 = arith.constant 3.200000e+01 : f32
    %29 = vector.broadcast %cst_17 : f32 to vector<16x1xf32>
    %30 = arith.divf %28, %29 : vector<16x1xf32>
    %31 = vector.broadcast %30 : vector<16x1xf32> to vector<16x32xf32>
    %32 = arith.subf %26, %31 : vector<16x32xf32>
    %33 = arith.mulf %32, %32 : vector<16x32xf32>
    %cst_18 = arith.constant dense<0.000000e+00> : vector<16xf32>
    %34 = vector.multi_reduction <add>, %33, %cst_18 [1] : vector<16x32xf32> to vector<16xf32>
    %35 = vector.shape_cast %34 : vector<16xf32> to vector<16x1xf32>
    %cst_19 = arith.constant 3.200000e+01 : f32
    %36 = vector.broadcast %cst_19 : f32 to vector<16x1xf32>
    %37 = arith.divf %35, %36 : vector<16x1xf32>
    %cst_20 = arith.constant 9.99999996E-13 : f32
    %38 = vector.broadcast %cst_20 : f32 to vector<16x1xf32>
    %39 = arith.addf %37, %38 : vector<16x1xf32>
    %40 = math.rsqrt %39 : vector<16x1xf32>
    %41 = vector.broadcast %40 : vector<16x1xf32> to vector<16x32xf32>
    %42 = arith.mulf %32, %41 : vector<16x32xf32>
    %43 = vector.broadcast %4 : vector<1x32xf32> to vector<16x32xf32>
    %44 = arith.mulf %42, %43 : vector<16x32xf32>
    %45 = vector.broadcast %5 : vector<1x32xf32> to vector<16x32xf32>
    %46 = arith.addf %44, %45 : vector<16x32xf32>
    %cst_21 = arith.constant dense<0.000000e+00> : vector<16x64xf32>
    %47 = tpu.matmul %46, %10, %cst_21 {dimension_numbers = #tpu.dot_dimension_numbers<[1], [0], [0], [1], [0, 0, 1, 1], [], []>} : vector<16x32xf32>, vector<32x64xf32>, vector<16x64xf32> -> vector<16x64xf32>
    %48 = vector.broadcast %11 : vector<1x64xf32> to vector<16x64xf32>
    %49 = arith.addf %47, %48 : vector<16x64xf32>
    %cst_22 = arith.constant 5.000000e-01 : f32
    %50 = vector.broadcast %cst_22 : f32 to vector<16x64xf32>
    %51 = arith.mulf %49, %50 : vector<16x64xf32>
    %cst_23 = arith.constant 0.707106769 : f32
    %52 = vector.broadcast %cst_23 : f32 to vector<16x64xf32>
    %53 = arith.mulf %49, %52 : vector<16x64xf32>
    %54 = math.erf %53 : vector<16x64xf32>
    %cst_24 = arith.constant 1.000000e+00 : f32
    %55 = vector.broadcast %cst_24 : f32 to vector<16x64xf32>
    %56 = arith.addf %55, %54 : vector<16x64xf32>
    %57 = arith.mulf %51, %56 : vector<16x64xf32>
    %cst_25 = arith.constant dense<0.000000e+00> : vector<16x32xf32>
    %58 = tpu.matmul %57, %9, %cst_25 {dimension_numbers = #tpu.dot_dimension_numbers<[1], [0], [0], [1], [0, 0, 1, 1], [], []>} : vector<16x64xf32>, vector<64x32xf32>, vector<16x32xf32> -> vector<16x32xf32>
    %59 = vector.broadcast %8 : vector<1x32xf32> to vector<16x32xf32>
    %60 = arith.addf %58, %59 : vector<16x32xf32>
    %61 = arith.addf %60, %46 : vector<16x32xf32>
    %cst_26 = arith.constant dense<0.000000e+00> : vector<16xf32>
    %62 = vector.multi_reduction <add>, %61, %cst_26 [1] : vector<16x32xf32> to vector<16xf32>
    %63 = vector.shape_cast %62 : vector<16xf32> to vector<16x1xf32>
    %cst_27 = arith.constant 3.200000e+01 : f32
    %64 = vector.broadcast %cst_27 : f32 to vector<16x1xf32>
    %65 = arith.divf %63, %64 : vector<16x1xf32>
    %66 = vector.broadcast %65 : vector<16x1xf32> to vector<16x32xf32>
    %67 = arith.subf %61, %66 : vector<16x32xf32>
    %68 = arith.mulf %67, %67 : vector<16x32xf32>
    %cst_28 = arith.constant dense<0.000000e+00> : vector<16xf32>
    %69 = vector.multi_reduction <add>, %68, %cst_28 [1] : vector<16x32xf32> to vector<16xf32>
    %70 = vector.shape_cast %69 : vector<16xf32> to vector<16x1xf32>
    %cst_29 = arith.constant 3.200000e+01 : f32
    %71 = vector.broadcast %cst_29 : f32 to vector<16x1xf32>
    %72 = arith.divf %70, %71 : vector<16x1xf32>
    %cst_30 = arith.constant 9.99999996E-13 : f32
    %73 = vector.broadcast %cst_30 : f32 to vector<16x1xf32>
    %74 = arith.addf %72, %73 : vector<16x1xf32>
    %75 = math.rsqrt %74 : vector<16x1xf32>
    %76 = vector.broadcast %75 : vector<16x1xf32> to vector<16x32xf32>
    %77 = arith.mulf %67, %76 : vector<16x32xf32>
    %78 = vector.broadcast %6 : vector<1x32xf32> to vector<16x32xf32>
    %79 = arith.mulf %77, %78 : vector<16x32xf32>
    %80 = vector.broadcast %7 : vector<1x32xf32> to vector<16x32xf32>
    %81 = arith.addf %79, %80 : vector<16x32xf32>
    %c0_31 = arith.constant 0 : index
    %c0_32 = arith.constant 0 : index
    %82 = vector.load %arg4[%c0_31, %c0_32] : memref<16x32xf32, #tpu.memory_space<vmem>>, vector<16x32xf32>
    tpu.vector_store %arg4[%c0_31, %c0_32], %81 {strides = array<i32>} : memref<16x32xf32, #tpu.memory_space<vmem>>, vector<16x32xf32>,
    return
  }
  func.func @transform_0(%arg0: i32) -> (i32, i32) {
    %c0_i32 = arith.constant 0 : i32
    %c0_i32_0 = arith.constant 0 : i32
    return %arg0, %c0_i32 : i32, i32
  }
  func.func @transform_1(%arg0: i32) -> (i32, i32) {
    %c0_i32 = arith.constant 0 : i32
    %c0_i32_0 = arith.constant 0 : i32
    %c0_i32_1 = arith.constant 0 : i32
    return %c0_i32, %c0_i32_0 : i32, i32
  }
  func.func @transform_2(%arg0: i32) -> (i32, i32) {
    %c0_i32 = arith.constant 0 : i32
    %c0_i32_0 = arith.constant 0 : i32
    %c0_i32_1 = arith.constant 0 : i32
    return %c0_i32, %c0_i32_0 : i32, i32
  }
  func.func @transform_3(%arg0: i32) -> (i32, i32) {
    %c0_i32 = arith.constant 0 : i32
    %c0_i32_0 = arith.constant 0 : i32
    return %arg0, %c0_i32 : i32, i32
  }
}

</mosaic_0001>

<llo_original>
// kernel: tpu_custom_call.1
$region0: #{tpu_custom_call.1}
  #allocation0 [shape = 'u32[]', space=smem, size = 0x4, offset = 0x4, fixed_abs, tag = 'smem constant byte address 0x4 - core index']
  #allocation1 [shape = 'u32[144,128]{1,0:T(1,128)}', space=vmem, size = 0x12000, scoped, tag = 'internal scratch']
  %s0 = inlined_call_operand.vmem [shape: f32[16,32], index: 0, kind: input, shape index: {}]
  %s1 = inlined_call_operand.vmem [shape: f32[128,32], index: 1, kind: input, shape index: {}]
  %s2 = inlined_call_operand.vmem [shape: f32[40,64], index: 2, kind: input, shape index: {}]
  %s3 = inlined_call_operand.hbm [shape: f32[16,32], index: 3, kind: output, shape index: {}]
  %s4 = sld [smem:[#allocation0]]
  $region22: #{tpu_custom_call.1} parent=0
    _
  %s6 = ssub.s32 1, %s4
  %s7 = scalar_select 0, %s6, %s4
  $region1: #{tpu_custom_call.1} parent=0
    #allocation2 [shape = 'u8[8192]{0}', space=vmem, size = 0x2000, scoped, tag = 'output window, operand 0, single buffered']
    #allocation3 [shape = 's32[1]{0}', space=sflag, size = 0x4, scoped, tag = 'scoped memory for tpu_custom_call.1']
    %8 = vsyncpa [#allocation3], 0
    // Predicated region
    $region2: #{tpu_custom_call.1} parent=1 // pred_check
      _
    $region3: #{tpu_custom_call.1} parent=1 // pred_check_branch
      %10 = sbr.rel (0) target = $region5
    $region4: #{tpu_custom_call.1} parent=1 // pred_region
      _
    $region5: #{tpu_custom_call.1} parent=1 // pred_fallthru
      _
    // Predicated region
    $region6: #{tpu_custom_call.1} parent=1 // pred_check
      _
    $region7: #{tpu_custom_call.1} parent=1 // pred_check_branch
      %12 = sbr.rel (0) target = $region9
    $region8: #{tpu_custom_call.1} parent=1 // pred_region
      _
    $region9: #{tpu_custom_call.1} parent=1 // pred_fallthru
      _
    // Predicated region
    $region10: #{tpu_custom_call.1} parent=1 // pred_check
      _
    $region11: #{tpu_custom_call.1} parent=1 // pred_check_branch
      %14 = sbr.rel (0) target = $region13
    $region12: #{tpu_custom_call.1} parent=1 // pred_region
      _
    $region13: #{tpu_custom_call.1} parent=1 // pred_fallthru
      _
    %v15 = vld [vmem:[%s0] sm:$0xff]
    %v16 = vld [vmem:[%s0 + $0x8] sm:$0xff]
    %v17 = vld [vmem:[%s1] sm:$0xff]
    %v18 = vld [vmem:[%s1 + $0x8] sm:$0xff]
    %v19 = vld [vmem:[%s1 + $0x10] sm:$0xf]
    %v20 = vld [vmem:[%s1 + $0x18] sm:$0xff]
    %v21 = vld [vmem:[%s1 + $0x20] sm:$0xff]
    %v22 = vld [vmem:[%s1 + $0x28] sm:$0xff]
    %v23 = vld [vmem:[%s1 + $0x30] sm:$0xf]
    %v24 = vld [vmem:[%s1 + $0x38] sm:$0x1]
    %v25 = vld [vmem:[%s1 + $0x39] sm:$0x1]
    %v26 = vld [vmem:[%s1 + $0x3a] sm:$0x1]
    %v27 = vld [vmem:[%s1 + $0x3b] sm:$0x1]
    %v28 = vld [vmem:[%s1 + $0x3c] sm:$0x1]
    %v29 = vld [vmem:[%s1 + $0x40] sm:$0xff]
    %v30 = vld [vmem:[%s1 + $0x48] sm:$0xff]
    %v31 = vld [vmem:[%s1 + $0x50] sm:$0xff]
    %v32 = vld [vmem:[%s1 + $0x58] sm:$0xff]
    %v33 = vld [vmem:[%s1 + $0x60] sm:$0xff]
    %v34 = vld [vmem:[%s1 + $0x68] sm:$0xff]
    %v35 = vld [vmem:[%s1 + $0x70] sm:$0xff]
    %v36 = vld [vmem:[%s1 + $0x78] sm:$0xff]
    %v37 = vld [vmem:[%s2] sm:$0xff]
    %v38 = vld [vmem:[%s2 + $0x8] sm:$0xff]
    %v39 = vld [vmem:[%s2 + $0x10] sm:$0xff]
    %v40 = vld [vmem:[%s2 + $0x18] sm:$0xff]
    %v41 = vld [vmem:[%s2 + $0x20] sm:$0x1]
    %vm42 = vcmask 64512
    %v44 = vsel %vm42, %v17, 0
    %v47 = vsel %vm42, %v18, 0
    %v50 = vsel %vm42, %v19, 0
    %52 = vmatprep.subr.mxu0 0.0
    %53 = vmatpush1.msra.mxu0 0.0
    %54 = vmatprep.subr.mxu0 0.0
    %55 = vmatpush1.msra.mxu0 0.0
    %56 = vmatprep.subr.mxu0 0.0
    %57 = vmatpush1.msra.mxu0 0.0
    %58 = vmatprep.subr.mxu0 0.0
    %59 = vmatpush1.msra.mxu0 0.0
    %60 = vmatprep.subr.mxu0 0.0
    %61 = vmatpush1.msra.mxu0 0.0
    %62 = vmatprep.subr.mxu0 0.0
    %63 = vmatpush1.msra.mxu0 0.0
    %64 = vmatprep.subr.mxu0 0.0
    %65 = vmatpush1.msra.mxu0 0.0
    %66 = vmatprep.subr.mxu0 0.0
    %67 = vmatpush1.msra.mxu0 0.0
    %68 = vmatprep.subr.mxu0 0.0
    %69 = vmatpush1.msra.mxu0 0.0
    %70 = vmatprep.subr.mxu0 0.0
    %71 = vmatpush1.msra.mxu0 0.0
    %72 = vmatprep.subr.mxu0 0.0
    %73 = vmatpush1.msra.mxu0 0.0
    %74 = vmatprep.subr.mxu0 0.0
    %75 = vmatpush1.msra.mxu0 0.0
    %76 = vmatprep.subr.mxu0 0.0
    %77 = vmatpush1.msra.mxu0 0.0
    %78 = vmatprep.subr.mxu0 0.0
    %79 = vmatpush1.msra.mxu0 0.0
    %80 = vmatprep.subr.mxu0 0.0
    %81 = vmatpush1.msra.mxu0 0.0
    %82 = vmatprep.subr.mxu0 0.0
    %83 = vmatpush1.msra.mxu0 %v15
    %84 = vmatprep.subr.mxu0 0.0
    %85 = vmatpush2.msra.mxu0 0.0
    %86 = vmatprep.subr.mxu0 0.0
    %87 = vmatpush2.msra.mxu0 0.0
    %88 = vmatprep.subr.mxu0 0.0
    %89 = vmatpush2.msra.mxu0 0.0
    %90 = vmatprep.subr.mxu0 0.0
    %91 = vmatpush2.msra.mxu0 0.0
    %92 = vmatprep.subr.mxu0 0.0
    %93 = vmatpush2.msra.mxu0 0.0
    %94 = vmatprep.subr.mxu0 0.0
    %95 = vmatpush2.msra.mxu0 0.0
    %96 = vmatprep.subr.mxu0 0.0
    %97 = vmatpush2.msra.mxu0 0.0
    %98 = vmatprep.subr.mxu0 0.0
    %99 = vmatpush2.msra.mxu0 0.0
    %100 = vmatprep.subr.mxu0 0.0
    %101 = vmatpush2.msra.mxu0 0.0
    %102 = vmatprep.subr.mxu0 0.0
    %103 = vmatpush2.msra.mxu0 0.0
    %104 = vmatprep.subr.mxu0 0.0
    %105 = vmatpush2.msra.mxu0 0.0
    %106 = vmatprep.subr.mxu0 0.0
    %107 = vmatpush2.msra.mxu0 0.0
    %108 = vmatprep.subr.mxu0 0.0
    %109 = vmatpush2.msra.mxu0 0.0
    %110 = vmatprep.subr.mxu0 0.0
    %111 = vmatpush2.msra.mxu0 0.0
    %112 = vmatprep.subr.mxu0 0.0
    %113 = vmatpush2.msra.mxu0 0.0
    %114 = vmatprep.subr.mxu0 0.0
    %115 = vmatpush2.msra.mxu0 0.0
    %116 = vmatprep.mubr.f32.mxu0 0.0
    %117 = vmatmul.mubr.f32.gmra.mxu0 %v44
    %v118 = vpop.f32.mrf.mxu0
    %v119 = vadd.f32 0.0, %v118
    %v120 = vpop.f32.mrf.mxu0
    %121 = vmatprep.mubr.f32.mxu0 0.0
    %122 = vmatmul.mubr.f32.gmra.mxu0 %v47
    %v123 = vpop.f32.mrf.mxu0
    %v124 = vadd.f32 0.0, %v123
    %v125 = vpop.f32.mrf.mxu0
    %126 = vmatprep.mubr.f32.mxu0 0.0
    %127 = vmatmul.mubr.f32.gmra.mxu0 %v50
    %v128 = vpop.f32.mrf.mxu0
    %v129 = vadd.f32 0.0, %v128
    %v130 = vpop.f32.mrf.mxu0
    %131 = vdwg.mxu0
    %132 = vmatprep.subr.mxu0 0.0
    %133 = vmatpush1.msra.mxu0 0.0
    %134 = vmatprep.subr.mxu0 0.0
    %135 = vmatpush1.msra.mxu0 0.0
    %136 = vmatprep.subr.mxu0 0.0
    %137 = vmatpush1.msra.mxu0 0.0
    %138 = vmatprep.subr.mxu0 0.0
    %139 = vmatpush1.msra.mxu0 0.0
    %140 = vmatprep.subr.mxu0 0.0
    %141 = vmatpush1.msra.mxu0 0.0
    %142 = vmatprep.subr.mxu0 0.0
    %143 = vmatpush1.msra.mxu0 0.0
    %144 = vmatprep.subr.mxu0 0.0
    %145 = vmatpush1.msra.mxu0 0.0
    %146 = vmatprep.subr.mxu0 0.0
    %147 = vmatpush1.msra.mxu0 0.0
    %148 = vmatprep.subr.mxu0 0.0
    %149 = vmatpush1.msra.mxu0 0.0
    %150 = vmatprep.subr.mxu0 0.0
    %151 = vmatpush1.msra.mxu0 0.0
    %152 = vmatprep.subr.mxu0 0.0
    %153 = vmatpush1.msra.mxu0 0.0
    %154 = vmatprep.subr.mxu0 0.0
    %155 = vmatpush1.msra.mxu0 0.0
    %156 = vmatprep.subr.mxu0 0.0
    %157 = vmatpush1.msra.mxu0 0.0
    %158 = vmatprep.subr.mxu0 0.0
    %159 = vmatpush1.msra.mxu0 0.0
    %160 = vmatprep.subr.mxu0 0.0
    %161 = vmatpush1.msra.mxu0 0.0
    %162 = vmatprep.subr.mxu0 0.0
    %163 = vmatpush1.msra.mxu0 %v16
    %164 = vmatprep.subr.mxu0 0.0
    %165 = vmatpush2.msra.mxu0 0.0
    %166 = vmatprep.subr.mxu0 0.0
    %167 = vmatpush2.msra.mxu0 0.0
    %168 = vmatprep.subr.mxu0 0.0
    %169 = vmatpush2.msra.mxu0 0.0
    %170 = vmatprep.subr.mxu0 0.0
    %171 = vmatpush2.msra.mxu0 0.0
    %172 = vmatprep.subr.mxu0 0.0
    %173 = vmatpush2.msra.mxu0 0.0
    %174 = vmatprep.subr.mxu0 0.0
    %175 = vmatpush2.msra.mxu0 0.0
    %176 = vmatprep.subr.mxu0 0.0
    %177 = vmatpush2.msra.mxu0 0.0
    %178 = vmatprep.subr.mxu0 0.0
    %179 = vmatpush2.msra.mxu0 0.0
    %180 = vmatprep.subr.mxu0 0.0
    %181 = vmatpush2.msra.mxu0 0.0
    %182 = vmatprep.subr.mxu0 0.0
    %183 = vmatpush2.msra.mxu0 0.0
    %184 = vmatprep.subr.mxu0 0.0
    %185 = vmatpush2.msra.mxu0 0.0
    %186 = vmatprep.subr.mxu0 0.0
    %187 = vmatpush2.msra.mxu0 0.0
    %188 = vmatprep.subr.mxu0 0.0
    %189 = vmatpush2.msra.mxu0 0.0
    %190 = vmatprep.subr.mxu0 0.0
    %191 = vmatpush2.msra.mxu0 0.0
    %192 = vmatprep.subr.mxu0 0.0
    %193 = vmatpush2.msra.mxu0 0.0
    %194 = vmatprep.subr.mxu0 0.0
    %195 = vmatpush2.msra.mxu0 0.0
    %196 = vmatprep.mubr.f32.mxu0 0.0
    %197 = vmatmul.mubr.f32.gmra.mxu0 %v44
    %v198 = vpop.f32.mrf.mxu0
    %v199 = vadd.f32 0.0, %v198
    %v200 = vpop.f32.mrf.mxu0
    %201 = vmatprep.mubr.f32.mxu0 0.0
    %202 = vmatmul.mubr.f32.gmra.mxu0 %v47
    %v203 = vpop.f32.mrf.mxu0
    %v204 = vadd.f32 0.0, %v203
    %v205 = vpop.f32.mrf.mxu0
    %206 = vmatprep.mubr.f32.mxu0 0.0
    %207 = vmatmul.mubr.f32.gmra.mxu0 %v50
    %v208 = vpop.f32.mrf.mxu0
    %v209 = vadd.f32 0.0, %v208
    %v210 = vpop.f32.mrf.mxu0
    %211 = vdwg.mxu0
    %v212 = vmul.f32 %v119, %v21
    %v213 = vmul.f32 %v124, %v22
    %v214 = vmul.f32 %v129, %v23
    %v215 = vmul.f32 %v199, %v21
    %v216 = vmul.f32 %v204, %v22
    %v217 = vmul.f32 %v209, %v23
    %vm218 = vcmask 162816
    %v220 = vsel %vm218, %v20, 0
    %vm222 = vcmask 1043456
    %v224 = vsel %vm222, %v214, 0
    %226 = vmatprep.subr.mxu0 0.0
    %227 = vmatpush1.msra.mxu0 0.0
    %228 = vmatprep.subr.mxu0 0.0
    %229 = vmatpush1.msra.mxu0 0.0
    %230 = vmatprep.subr.mxu0 0.0
    %231 = vmatpush1.msra.mxu0 0.0
    %232 = vmatprep.subr.mxu0 0.0
    %233 = vmatpush1.msra.mxu0 0.0
    %234 = vmatprep.subr.mxu0 0.0
    %235 = vmatpush1.msra.mxu0 0.0
    %236 = vmatprep.subr.mxu0 0.0
    %237 = vmatpush1.msra.mxu0 0.0
    %238 = vmatprep.subr.mxu0 0.0
    %239 = vmatpush1.msra.mxu0 0.0
    %240 = vmatprep.subr.mxu0 0.0
    %241 = vmatpush1.msra.mxu0 0.0
    %242 = vmatprep.subr.mxu0 0.0
    %243 = vmatpush1.msra.mxu0 0.0
    %244 = vmatprep.subr.mxu0 0.0
    %245 = vmatpush1.msra.mxu0 0.0
    %246 = vmatprep.subr.mxu0 0.0
    %247 = vmatpush1.msra.mxu0 0.0
    %248 = vmatprep.subr.mxu0 0.0
    %249 = vmatpush1.msra.mxu0 0.0
    %250 = vmatprep.subr.mxu0 0.0
    %251 = vmatpush1.msra.mxu0 0.0
    %252 = vmatprep.subr.mxu0 0.0
    %253 = vmatpush1.msra.mxu0 %v224
    %254 = vmatprep.subr.mxu0 0.0
    %255 = vmatpush1.msra.mxu0 %v213
    %256 = vmatprep.subr.mxu0 0.0
    %257 = vmatpush1.msra.mxu0 %v212
    %258 = vmatprep.subr.mxu0 0.0
    %259 = vmatpush2.msra.mxu0 0.0
    %260 = vmatprep.subr.mxu0 0.0
    %261 = vmatpush2.msra.mxu0 0.0
    %262 = vmatprep.subr.mxu0 0.0
    %263 = vmatpush2.msra.mxu0 0.0
    %264 = vmatprep.subr.mxu0 0.0
    %265 = vmatpush2.msra.mxu0 0.0
    %266 = vmatprep.subr.mxu0 0.0
    %267 = vmatpush2.msra.mxu0 0.0
    %268 = vmatprep.subr.mxu0 0.0
    %269 = vmatpush2.msra.mxu0 0.0
    %270 = vmatprep.subr.mxu0 0.0
    %271 = vmatpush2.msra.mxu0 0.0
    %272 = vmatprep.subr.mxu0 0.0
    %273 = vmatpush2.msra.mxu0 0.0
    %274 = vmatprep.subr.mxu0 0.0
    %275 = vmatpush2.msra.mxu0 0.0
    %276 = vmatprep.subr.mxu0 0.0
    %277 = vmatpush2.msra.mxu0 0.0
    %278 = vmatprep.subr.mxu0 0.0
    %279 = vmatpush2.msra.mxu0 0.0
    %280 = vmatprep.subr.mxu0 0.0
    %281 = vmatpush2.msra.mxu0 0.0
    %282 = vmatprep.subr.mxu0 0.0
    %283 = vmatpush2.msra.mxu0 0.0
    %284 = vmatprep.subr.mxu0 0.0
    %285 = vmatpush2.msra.mxu0 0.0
    %286 = vmatprep.subr.mxu0 0.0
    %287 = vmatpush2.msra.mxu0 0.0
    %288 = vmatprep.subr.mxu0 0.0
    %289 = vmatpush2.msra.mxu0 0.0
    %290 = vmatprep.mubr.f32.mxu0 0.0
    %291 = vmatmul.mubr.f32.gmra.mxu0 %v220
    %v292 = vpop.f32.mrf.mxu0
    %v293 = vadd.f32 0.0, %v292
    %v294 = vpop.f32.mrf.mxu0
    %295 = vdwg.mxu0
    %v297 = vsel %vm222, %v217, 0
    %299 = vmatprep.subr.mxu0 0.0
    %300 = vmatpush1.msra.mxu0 0.0
    %301 = vmatprep.subr.mxu0 0.0
    %302 = vmatpush1.msra.mxu0 0.0
    %303 = vmatprep.subr.mxu0 0.0
    %304 = vmatpush1.msra.mxu0 0.0
    %305 = vmatprep.subr.mxu0 0.0
    %306 = vmatpush1.msra.mxu0 0.0
    %307 = vmatprep.subr.mxu0 0.0
    %308 = vmatpush1.msra.mxu0 0.0
    %309 = vmatprep.subr.mxu0 0.0
    %310 = vmatpush1.msra.mxu0 0.0
    %311 = vmatprep.subr.mxu0 0.0
    %312 = vmatpush1.msra.mxu0 0.0
    %313 = vmatprep.subr.mxu0 0.0
    %314 = vmatpush1.msra.mxu0 0.0
    %315 = vmatprep.subr.mxu0 0.0
    %316 = vmatpush1.msra.mxu0 0.0
    %317 = vmatprep.subr.mxu0 0.0
    %318 = vmatpush1.msra.mxu0 0.0
    %319 = vmatprep.subr.mxu0 0.0
    %320 = vmatpush1.msra.mxu0 0.0
    %321 = vmatprep.subr.mxu0 0.0
    %322 = vmatpush1.msra.mxu0 0.0
    %323 = vmatprep.subr.mxu0 0.0
    %324 = vmatpush1.msra.mxu0 0.0
    %325 = vmatprep.subr.mxu0 0.0
    %326 = vmatpush1.msra.mxu0 %v297
    %327 = vmatprep.subr.mxu0 0.0
    %328 = vmatpush1.msra.mxu0 %v216
    %329 = vmatprep.subr.mxu0 0.0
    %330 = vmatpush1.msra.mxu0 %v215
    %331 = vmatprep.subr.mxu0 0.0
    %332 = vmatpush2.msra.mxu0 0.0
    %333 = vmatprep.subr.mxu0 0.0
    %334 = vmatpush2.msra.mxu0 0.0
    %335 = vmatprep.subr.mxu0 0.0
    %336 = vmatpush2.msra.mxu0 0.0
    %337 = vmatprep.subr.mxu0 0.0
    %338 = vmatpush2.msra.mxu0 0.0
    %339 = vmatprep.subr.mxu0 0.0
    %340 = vmatpush2.msra.mxu0 0.0
    %341 = vmatprep.subr.mxu0 0.0
    %342 = vmatpush2.msra.mxu0 0.0
    %343 = vmatprep.subr.mxu0 0.0
    %344 = vmatpush2.msra.mxu0 0.0
    %345 = vmatprep.subr.mxu0 0.0
    %346 = vmatpush2.msra.mxu0 0.0
    %347 = vmatprep.subr.mxu0 0.0
    %348 = vmatpush2.msra.mxu0 0.0
    %349 = vmatprep.subr.mxu0 0.0
    %350 = vmatpush2.msra.mxu0 0.0
    %351 = vmatprep.subr.mxu0 0.0
    %352 = vmatpush2.msra.mxu0 0.0
    %353 = vmatprep.subr.mxu0 0.0
    %354 = vmatpush2.msra.mxu0 0.0
    %355 = vmatprep.subr.mxu0 0.0
    %356 = vmatpush2.msra.mxu0 0.0
    %357 = vmatprep.subr.mxu0 0.0
    %358 = vmatpush2.msra.mxu0 0.0
    %359 = vmatprep.subr.mxu0 0.0
    %360 = vmatpush2.msra.mxu0 0.0
    %361 = vmatprep.subr.mxu0 0.0
    %362 = vmatpush2.msra.mxu0 0.0
    %363 = vmatprep.mubr.f32.mxu0 0.0
    %364 = vmatmul.mubr.f32.gmra.mxu0 %v220
    %v365 = vpop.f32.mrf.mxu0
    %v366 = vadd.f32 0.0, %v365
    %v367 = vpop.f32.mrf.mxu0
    %368 = vdwg.mxu0
    %v369 = vadd.f32 %v293, %v15
    %v370 = vadd.f32 %v366, %v16
    %vm371 = vcmask 261120
    %v372 = vsel %vm371, %v369, 0.0
    %373 = vadd.xlane.f32.xlu0 %v372
    %v374 = vpop.xlane.xlu0 %373
    %v375 = vsel %vm371, %v370, 0.0
    %376 = vadd.xlane.f32.xlu0 %v375
    %v377 = vpop.xlane.xlu0 %376
    %v378 = vrcp.pop 32.0
    %v379 = vmul.f32 %v374, %v378
    %v380 = vmul.f32 %v377, %v378
    %v381 = vsub.f32 %v369, %v379
    %v382 = vsub.f32 %v370, %v380
    %v383 = vmul.f32 %v381, %v381
    %v384 = vmul.f32 %v382, %v382
    %v385 = vsel %vm371, %v383, 0.0
    %386 = vadd.xlane.f32.xlu0 %v385
    %v387 = vpop.xlane.xlu0 %386
    %v388 = vsel %vm371, %v384, 0.0
    %389 = vadd.xlane.f32.xlu0 %v388
    %v390 = vpop.xlane.xlu0 %389
    %v391 = vmul.f32 %v387, %v378
    %v392 = vmul.f32 %v390, %v378
    %v393 = vadd.f32 %v391, 1e-12
    %v394 = vadd.f32 %v392, 1e-12
    %v395 = vrsqrt.pop %v393
    %v396 = vrsqrt.pop %v394
    %v397 = vmul.f32 %v381, %v395
    %v398 = vmul.f32 %v382, %v396
    %v399 = vlaneseq
    %v400 = vshrl.u32 %v399, 7
    %v401 = vsub.s32 0, %v400
    %v402 = vrot.slane %v24, %v401
    %v403 = vmul.f32 %v397, %v402
    %v404 = vmul.f32 %v398, %v402
    %v405 = vlaneseq
    %v406 = vshrl.u32 %v405, 7
    %v407 = vsub.s32 0, %v406
    %v408 = vrot.slane %v25, %v407
    %v409 = vadd.f32 %v403, %v408
    %v410 = vadd.f32 %v404, %v408
    %v411 = vlaneseq
    %v412 = vshrl.u32 %v411, 7
    %v413 = vsub.s32 0, %v412
    %v414 = vrot.slane %v41, %v413
    %v416 = vsel %vm371, %v409, 0
    %v419 = vsel %vm371, %v410, 0
    %421 = vmatprep.subr.mxu0 0.0
    %422 = vmatpush1.msra.mxu0 0.0
    %423 = vmatprep.subr.mxu0 0.0
    %424 = vmatpush1.msra.mxu0 0.0
    %425 = vmatprep.subr.mxu0 0.0
    %426 = vmatpush1.msra.mxu0 0.0
    %427 = vmatprep.subr.mxu0 0.0
    %428 = vmatpush1.msra.mxu0 0.0
    %429 = vmatprep.subr.mxu0 0.0
    %430 = vmatpush1.msra.mxu0 0.0
    %431 = vmatprep.subr.mxu0 0.0
    %432 = vmatpush1.msra.mxu0 0.0
    %433 = vmatprep.subr.mxu0 0.0
    %434 = vmatpush1.msra.mxu0 0.0
    %435 = vmatprep.subr.mxu0 0.0
    %436 = vmatpush1.msra.mxu0 0.0
    %437 = vmatprep.subr.mxu0 0.0
    %438 = vmatpush1.msra.mxu0 0.0
    %439 = vmatprep.subr.mxu0 0.0
    %440 = vmatpush1.msra.mxu0 0.0
    %441 = vmatprep.subr.mxu0 0.0
    %442 = vmatpush1.msra.mxu0 0.0
    %443 = vmatprep.subr.mxu0 0.0
    %444 = vmatpush1.msra.mxu0 0.0
    %445 = vmatprep.subr.mxu0 0.0
    %446 = vmatpush1.msra.mxu0 %v40
    %447 = vmatprep.subr.mxu0 0.0
    %448 = vmatpush1.msra.mxu0 %v39
    %449 = vmatprep.subr.mxu0 0.0
    %450 = vmatpush1.msra.mxu0 %v38
    %451 = vmatprep.subr.mxu0 0.0
    %452 = vmatpush1.msra.mxu0 %v37
    %453 = vmatprep.subr.mxu0 0.0
    %454 = vmatpush2.msra.mxu0 0.0
    %455 = vmatprep.subr.mxu0 0.0
    %456 = vmatpush2.msra.mxu0 0.0
    %457 = vmatprep.subr.mxu0 0.0
    %458 = vmatpush2.msra.mxu0 0.0
    %459 = vmatprep.subr.mxu0 0.0
    %460 = vmatpush2.msra.mxu0 0.0
    %461 = vmatprep.subr.mxu0 0.0
    %462 = vmatpush2.msra.mxu0 0.0
    %463 = vmatprep.subr.mxu0 0.0
    %464 = vmatpush2.msra.mxu0 0.0
    %465 = vmatprep.subr.mxu0 0.0
    %466 = vmatpush2.msra.mxu0 0.0
    %467 = vmatprep.subr.mxu0 0.0
    %468 = vmatpush2.msra.mxu0 0.0
    %469 = vmatprep.subr.mxu0 0.0
    %470 = vmatpush2.msra.mxu0 0.0
    %471 = vmatprep.subr.mxu0 0.0
    %472 = vmatpush2.msra.mxu0 0.0
    %473 = vmatprep.subr.mxu0 0.0
    %474 = vmatpush2.msra.mxu0 0.0
    %475 = vmatprep.subr.mxu0 0.0
    %476 = vmatpush2.msra.mxu0 0.0
    %477 = vmatprep.subr.mxu0 0.0
    %478 = vmatpush2.msra.mxu0 0.0
    %479 = vmatprep.subr.mxu0 0.0
    %480 = vmatpush2.msra.mxu0 0.0
    %481 = vmatprep.subr.mxu0 0.0
    %482 = vmatpush2.msra.mxu0 0.0
    %483 = vmatprep.subr.mxu0 0.0
    %484 = vmatpush2.msra.mxu0 0.0
    %485 = vmatprep.mubr.f32.mxu0 0.0
    %486 = vmatmul.mubr.f32.gmra.mxu0 %v416
    %v487 = vpop.f32.mrf.mxu0
    %v488 = vadd.f32 %v414, %v487
    %v489 = vpop.f32.mrf.mxu0
    %490 = vmatprep.mubr.f32.mxu0 0.0
    %491 = vmatmul.mubr.f32.gmra.mxu0 %v419
    %v492 = vpop.f32.mrf.mxu0
    %v493 = vadd.f32 %v414, %v492
    %v494 = vpop.f32.mrf.mxu0
    %495 = vdwg.mxu0
    %v496 = vmul.f32 %v488, 0.5
    %v497 = vmul.f32 %v493, 0.5
    %v498 = vmul.f32 %v488, 0.70710677
    %v499 = vmul.f32 %v493, 0.70710677
    %v500 = verf.f32.pop %v498
    %v501 = verf.f32.pop %v499
    %v502 = vadd.f32 %v500, 1.0
    %v503 = vadd.f32 %v501, 1.0
    %v504 = vmul.f32 %v496, %v502
    %v505 = vmul.f32 %v497, %v503
    %v506 = vlaneseq
    %v507 = vshrl.u32 %v506, 7
    %v508 = vsub.s32 0, %v507
    %v509 = vrot.slane %v28, %v508
    %vm510 = vcmask 523264
    %v512 = vsel %vm510, %v504, 0
    %v515 = vsel %vm510, %v505, 0
    %517 = vmatprep.subr.mxu0 0.0
    %518 = vmatpush1.msra.mxu0 0.0
    %519 = vmatprep.subr.mxu0 0.0
    %520 = vmatpush1.msra.mxu0 0.0
    %521 = vmatprep.subr.mxu0 0.0
    %522 = vmatpush1.msra.mxu0 0.0
    %523 = vmatprep.subr.mxu0 0.0
    %524 = vmatpush1.msra.mxu0 0.0
    %525 = vmatprep.subr.mxu0 0.0
    %526 = vmatpush1.msra.mxu0 0.0
    %527 = vmatprep.subr.mxu0 0.0
    %528 = vmatpush1.msra.mxu0 0.0
    %529 = vmatprep.subr.mxu0 0.0
    %530 = vmatpush1.msra.mxu0 0.0
    %531 = vmatprep.subr.mxu0 0.0
    %532 = vmatpush1.msra.mxu0 0.0
    %533 = vmatprep.subr.mxu0 0.0
    %534 = vmatpush1.msra.mxu0 %v36
    %535 = vmatprep.subr.mxu0 0.0
    %536 = vmatpush1.msra.mxu0 %v35
    %537 = vmatprep.subr.mxu0 0.0
    %538 = vmatpush1.msra.mxu0 %v34
    %539 = vmatprep.subr.mxu0 0.0
    %540 = vmatpush1.msra.mxu0 %v33
    %541 = vmatprep.subr.mxu0 0.0
    %542 = vmatpush1.msra.mxu0 %v32
    %543 = vmatprep.subr.mxu0 0.0
    %544 = vmatpush1.msra.mxu0 %v31
    %545 = vmatprep.subr.mxu0 0.0
    %546 = vmatpush1.msra.mxu0 %v30
    %547 = vmatprep.subr.mxu0 0.0
    %548 = vmatpush1.msra.mxu0 %v29
    %549 = vmatprep.subr.mxu0 0.0
    %550 = vmatpush2.msra.mxu0 0.0
    %551 = vmatprep.subr.mxu0 0.0
    %552 = vmatpush2.msra.mxu0 0.0
    %553 = vmatprep.subr.mxu0 0.0
    %554 = vmatpush2.msra.mxu0 0.0
    %555 = vmatprep.subr.mxu0 0.0
    %556 = vmatpush2.msra.mxu0 0.0
    %557 = vmatprep.subr.mxu0 0.0
    %558 = vmatpush2.msra.mxu0 0.0
    %559 = vmatprep.subr.mxu0 0.0
    %560 = vmatpush2.msra.mxu0 0.0
    %561 = vmatprep.subr.mxu0 0.0
    %562 = vmatpush2.msra.mxu0 0.0
    %563 = vmatprep.subr.mxu0 0.0
    %564 = vmatpush2.msra.mxu0 0.0
    %565 = vmatprep.subr.mxu0 0.0
    %566 = vmatpush2.msra.mxu0 0.0
    %567 = vmatprep.subr.mxu0 0.0
    %568 = vmatpush2.msra.mxu0 0.0
    %569 = vmatprep.subr.mxu0 0.0
    %570 = vmatpush2.msra.mxu0 0.0
    %571 = vmatprep.subr.mxu0 0.0
    %572 = vmatpush2.msra.mxu0 0.0
    %573 = vmatprep.subr.mxu0 0.0
    %574 = vmatpush2.msra.mxu0 0.0
    %575 = vmatprep.subr.mxu0 0.0
    %576 = vmatpush2.msra.mxu0 0.0
    %577 = vmatprep.subr.mxu0 0.0
    %578 = vmatpush2.msra.mxu0 0.0
    %579 = vmatprep.subr.mxu0 0.0
    %580 = vmatpush2.msra.mxu0 0.0
    %581 = vmatprep.mubr.f32.mxu0 0.0
    %582 = vmatmul.mubr.f32.gmra.mxu0 %v512
    %v583 = vpop.f32.mrf.mxu0
    %v584 = vadd.f32 %v509, %v583
    %v585 = vpop.f32.mrf.mxu0
    %586 = vmatprep.mubr.f32.mxu0 0.0
    %587 = vmatmul.mubr.f32.gmra.mxu0 %v515
    %v588 = vpop.f32.mrf.mxu0
    %v589 = vadd.f32 %v509, %v588
    %v590 = vpop.f32.mrf.mxu0
    %591 = vdwg.mxu0
    %v592 = vadd.f32 %v584, %v409
    %v593 = vadd.f32 %v589, %v410
    %v594 = vsel %vm371, %v592, 0.0
    %595 = vadd.xlane.f32.xlu0 %v594
    %v596 = vpop.xlane.xlu0 %595
    %v597 = vsel %vm371, %v593, 0.0
    %598 = vadd.xlane.f32.xlu0 %v597
    %v599 = vpop.xlane.xlu0 %598
    %v600 = vmul.f32 %v596, %v378
    %v601 = vmul.f32 %v599, %v378
    %v602 = vsub.f32 %v592, %v600
    %v603 = vsub.f32 %v593, %v601
    %v604 = vmul.f32 %v602, %v602
    %v605 = vmul.f32 %v603, %v603
    %v606 = vsel %vm371, %v604, 0.0
    %607 = vadd.xlane.f32.xlu0 %v606
    %v608 = vpop.xlane.xlu0 %607
    %v609 = vsel %vm371, %v605, 0.0
    %610 = vadd.xlane.f32.xlu0 %v609
    %v611 = vpop.xlane.xlu0 %610
    %v612 = vmul.f32 %v608, %v378
    %v613 = vmul.f32 %v611, %v378
    %v614 = vadd.f32 %v612, 1e-12
    %v615 = vadd.f32 %v613, 1e-12
    %v616 = vrsqrt.pop %v614
    %v617 = vrsqrt.pop %v615
    %v618 = vmul.f32 %v602, %v616
    %v619 = vmul.f32 %v603, %v617
    %v620 = vlaneseq
    %v621 = vshrl.u32 %v620, 7
    %v622 = vsub.s32 0, %v621
    %v623 = vrot.slane %v26, %v622
    %v624 = vmul.f32 %v618, %v623
    %v625 = vmul.f32 %v619, %v623
    %v626 = vlaneseq
    %v627 = vshrl.u32 %v626, 7
    %v628 = vsub.s32 0, %v627
    %v629 = vrot.slane %v27, %v628
    %v630 = vadd.f32 %v624, %v629
    %v631 = vadd.f32 %v625, %v629
    %632 = vst.msk [vmem:[#allocation2] sm:$0xff] %vm371, %v630
    %633 = vst.msk [vmem:[#allocation2 + $0x8] sm:$0xff] %vm371, %v631
    // Predicated region
    $region14: #{tpu_custom_call.1} parent=1 // pred_check
      _
    $region15: #{tpu_custom_call.1} parent=1 // pred_check_branch
      %635 = sbr.rel (0) target = $region17
    $region16: #{tpu_custom_call.1} parent=1 // pred_region
      %s637 = ssub.s32 256, 256
      %638 = vsyncadd [#allocation3], %s637
      %s639 = sshll.u32 [#allocation2], 4
      %s640 = int_to_ptr.vmem [resolvable:$true] %s639
      %645 = dma.vmem_to_hbm [thread:$0]  %s640, 256, %s3, [#allocation3], 128, 128, 8
    $region17: #{tpu_custom_call.1} parent=1 // pred_fallthru
      _
    // Predicated region
    $region18: #{tpu_custom_call.1} parent=1 // pred_check
      _
    $region19: #{tpu_custom_call.1} parent=1 // pred_check_branch
      %647 = sbr.rel (0) target = $region21
    $region20: #{tpu_custom_call.1} parent=1 // pred_region
      %648 = dma.done [#allocation3], 256
    $region21: #{tpu_custom_call.1} parent=1 // pred_fallthru
      _
    %649 = vsyncpa [#allocation3], 1

</llo_original>
